<compile_context>
chip_gen: v7x
topology: tpu7x:2x2x1
jax: 0.10.0
libtpu: 0.0.40
codegen_flags: <defaults>
</compile_context>

<pallas_src>
import functools

import jax
import jax.numpy as jnp
from jax.experimental import pallas as pl
from jax.experimental.pallas import tpu as pltpu


def _self_pooling_kernel(pv_ref, pb_ref, w_ref, bias_ref, o_ref, *,
                         tb, L, matmul_dtype, tail_dtype, approx_recip):
    # pv_ref  : (tb*L, Dout) probe_value tile (caller dtype)
    # pb_ref  : (tb*L, Din)  probe_base tile (caller dtype)
    # w_ref   : (Din, Dout)  featQ weight (caller dtype)
    # bias_ref: (1, Dout)    featQ bias
    # o_ref   : (tb, Dout)   pooled output (caller dtype)
    dout = w_ref.shape[-1]

    # featQ for all tb*L rows in one MXU matmul; MXU-dtype cast done here on
    # the VPU (under the inbound DMA) instead of as a standalone HBM pass.
    pb = pb_ref[...].astype(matmul_dtype)                     # (tb*L, Din)
    w = w_ref[...].astype(matmul_dtype)                       # (Din, Dout)
    qs = jnp.dot(pb, w, preferred_element_type=jnp.float32)   # (tb*L, Dout)
    qs = qs + bias_ref[...].astype(jnp.float32)
    qs = qs.reshape(tb, L, dout)            # free for f32 when L % 8 == 0

    # scores = mean_L(Qs) * Qs; softmax over L per (batch element, channel).
    qmean = jnp.mean(qs, axis=1, keepdims=True)               # (tb, 1, Dout)
    scores = qs * qmean                                       # (tb, L, Dout)
    m = jnp.max(scores, axis=1, keepdims=True)                # (tb, 1, Dout)

    # Optional bf16 tail (v6e/v7x bf16 VPU/EUP); reductions accumulate in f32.
    e = jnp.exp((scores - m).astype(tail_dtype))              # (tb, L, Dout)
    denom = jnp.sum(e, axis=1, dtype=jnp.float32)             # (tb, Dout)

    pv = pv_ref[...].astype(tail_dtype).reshape(tb, L, dout)  # (tb, L, Dout)
    num = jnp.sum(pv * e, axis=1, dtype=jnp.float32)          # (tb, Dout)

    if approx_recip:
        inv = pl.reciprocal(denom, approx=True)               # EUP slot, ~free
    else:
        inv = 1.0 / denom
    o_ref[...] = (num * inv).astype(o_ref.dtype)


def _round_up(x, m):
    return -(-x // m) * m


def _num_tensorcores():
    # v5e / v6e expose one TensorCore per chip; v4 / v5p / v7x expose two.
    try:
        kind = jax.devices()[0].device_kind.lower()
    except Exception:
        return 2
    if ("lite" in kind) or ("v5e" in kind) or ("v6e" in kind):
        return 1
    return 2


def _choose_tb(B, L, Din, Dout, pv_itemsize, pb_itemsize, ncores):
    # Lane padding: last dims occupy multiples of 128 lanes in VMEM / vregs.
    din_p = _round_up(max(Din, 1), 128)
    dout_p = _round_up(max(Dout, 1), 128)
    # Per-batch-element VMEM bytes: double-buffered pv + pb input tiles (at
    # their HBM dtypes) + ~4 live f32 (L, dout_p) intermediates
    # (qs / scores / e / pv_f32) + double-buffered output tile.
    per_b = (2 * L * (dout_p * pv_itemsize + din_p * pb_itemsize)
             + 4 * L * dout_p * 4
             + 2 * dout_p * 4)
    budget = 24 << 20                        # v7x-safe (64 MiB physical VMEM)
    tb_vmem = max(8, (budget // per_b) // 8 * 8)
    tb_rows = max(8, (2048 // max(L, 1)) // 8 * 8)   # ~2K MXU rows per step
    tb = min(tb_vmem, tb_rows)
    if ncores > 1:
        # Multi-TC chips: >= 2 grid steps per core so DMA stays pipelined.
        tb_split = (B // (2 * ncores)) // 8 * 8
        if tb_split >= 8:
            tb = min(tb, tb_split)
    return tb


def self_pooling_dir(probe_value, probe_base, w, bias, *, tb=None,
                     matmul_dtype=jnp.bfloat16, tail_dtype=jnp.float32,
                     approx_recip=True):
    """probe_value: (B, L, Dout), probe_base: (B, L, Din), w: (Din, Dout), bias: (Dout,)."""
    B, L, Din = probe_base.shape
    Dout = w.shape[1]
    assert probe_value.shape == (B, L, Dout)
    out_dtype = probe_value.dtype

    if tb is None:
        tb = _choose_tb(B, L, Din, Dout, probe_value.dtype.itemsize,
                        probe_base.dtype.itemsize, _num_tensorcores())
    if B >= 8:
        tb = max(8, min((tb // 8) * 8, _round_up(B, 8)))
    else:
        tb = B          # tiny batch: block dims equal the full array dims
    grid = pl.cdiv(B, tb)

    # Free metadata reshapes: stream the two big inputs as dense 2-D slabs.
    pv2d = probe_value.reshape(B * L, Dout)
    pb2d = probe_base.reshape(B * L, Din)
    bias2 = bias.reshape(1, Dout)

    kernel = functools.partial(_self_pooling_kernel, tb=tb, L=L,
                               matmul_dtype=matmul_dtype,
                               tail_dtype=tail_dtype,
                               approx_recip=approx_recip)
    out = pl.pallas_call(
        kernel,
        out_shape=jax.ShapeDtypeStruct((B, Dout), out_dtype),
        grid_spec=pltpu.PrefetchScalarGridSpec(
            num_scalar_prefetch=0,
            grid=(grid,),
            in_specs=[
                pl.BlockSpec((tb * L, Dout), lambda b: (b, 0)),   # probe_value
                pl.BlockSpec((tb * L, Din), lambda b: (b, 0)),    # probe_base
                pl.BlockSpec((Din, Dout), lambda b: (0, 0)),      # featQ weight
                pl.BlockSpec((1, Dout), lambda b: (0, 0)),        # featQ bias
            ],
            out_specs=pl.BlockSpec((tb, Dout), lambda b: (b, 0)),
        ),
        compiler_params=pltpu.CompilerParams(
            dimension_semantics=("parallel",),
            vmem_limit_bytes=48 * 1024 * 1024),
    )(pv2d, pb2d, w, bias2)
    return out


def _reference(probe_value, probe_base, w, bias):
    # Pure-JAX reference mirroring the PyTorch forward.
    B, L, Din = probe_base.shape
    Dout = w.shape[1]
    qs = probe_base.reshape(B * L, Din) @ w + bias        # (B*L, Dout)
    qs = qs.reshape(B, L, Dout)
    qmean = jnp.mean(qs, axis=1, keepdims=True)           # (B, 1, Dout)
    weights = qmean * qs                                  # (B, L, Dout)
    weights = jnp.transpose(weights, (0, 2, 1))           # (B, Dout, L)
    weights = jax.nn.softmax(weights, axis=-1)
    weights = jnp.transpose(weights, (0, 2, 1))           # (B, L, Dout)
    return jnp.sum(probe_value * weights, axis=1)         # (B, Dout)


if __name__ == "__main__":
    # Small deterministic shapes: batch=16, seq=8, input_num=32, output_num=32.
    B, L, Din, Dout = 16, 8, 32, 32

    key = jax.random.PRNGKey(0)
    k1, k2, k3, k4 = jax.random.split(key, 4)
    probe_value = jax.random.normal(k1, (B, L, Dout), dtype=jnp.float32)
    probe_base = jax.random.normal(k2, (B, L, Din), dtype=jnp.float32)
    # featQ = Linear(Din, Dout); deterministic init.
    w = jax.random.normal(k3, (Din, Dout), dtype=jnp.float32) * (1.0 / jnp.sqrt(Din))
    bias = jax.random.normal(k4, (Dout,), dtype=jnp.float32) * 0.01

    ref = _reference(probe_value, probe_base, w, bias)

    # 1) Exact path (f32 MXU inputs, exact reciprocal): tight numerical check.
    out_exact = jax.block_until_ready(
        self_pooling_dir(probe_value, probe_base, w, bias,
                         matmul_dtype=jnp.float32, approx_recip=False))
    assert out_exact.shape == (B, Dout) and out_exact.dtype == probe_value.dtype
    assert jnp.allclose(out_exact, ref, atol=1e-4, rtol=1e-4), (
        f"exact path: max abs err {jnp.max(jnp.abs(out_exact - ref))}")

    # 2) Fast path (default: in-kernel bf16 MXU cast + approx reciprocal),
    #    compared against a reference fed the same bf16-rounded matmul inputs.
    out_fast = jax.block_until_ready(self_pooling_dir(probe_value, probe_base, w, bias))
    ref_fast = _reference(probe_value,
                          probe_base.astype(jnp.bfloat16).astype(jnp.float32),
                          w.astype(jnp.bfloat16).astype(jnp.float32), bias)
    assert out_fast.shape == (B, Dout)
    assert jnp.allclose(out_fast, ref_fast, atol=1e-2, rtol=1e-2), (
        f"fast path: max abs err {jnp.max(jnp.abs(out_fast - ref_fast))}")

    # 3) bf16 softmax-tail path (worthwhile on v6e/v7x); loose tolerance.
    out_bf16 = jax.block_until_ready(
        self_pooling_dir(probe_value, probe_base, w, bias,
                         tail_dtype=jnp.bfloat16))
    assert jnp.allclose(out_bf16, ref_fast, atol=1e-1, rtol=1e-1), (
        f"bf16-tail path: max abs err {jnp.max(jnp.abs(out_bf16 - ref_fast))}")

    # 4) Ragged batch (B not a multiple of tb): exercises the cdiv grid with
    #    a partial last block whose garbage rows are never written back.
    out_rag = jax.block_until_ready(
        self_pooling_dir(probe_value[:11], probe_base[:11], w, bias,
                         matmul_dtype=jnp.float32, approx_recip=False, tb=8))
    assert out_rag.shape == (11, Dout)
    assert jnp.allclose(out_rag, ref[:11], atol=1e-4, rtol=1e-4), (
        f"ragged path: max abs err {jnp.max(jnp.abs(out_rag - ref[:11]))}")

    print("KERNEL_OK")
</pallas_src>

<mosaic_0001>
module attributes {stable_mosaic.version = 11 : i64} {
  func.func @_self_pooling_kernel(%arg0: i32, %arg1: memref<128x32xf32, #tpu.memory_space<vmem>>, %arg2: memref<128x32xf32, #tpu.memory_space<vmem>>, %arg3: memref<32x32xf32, #tpu.memory_space<vmem>>, %arg4: memref<1x32xf32, #tpu.memory_space<vmem>>, %arg5: memref<16x32xf32, #tpu.memory_space<vmem>>) attributes {dimension_semantics = [#tpu.dimension_semantics<parallel>], iteration_bounds = array<i64: 1>, scalar_prefetch = 0 : i64, scratch_operands = 0 : i64, tpu.core_type = #tpu.core_type<tc>, window_params = [{transform_indices = @transform_0, window_bounds = array<i64: 128, 32>}, {transform_indices = @transform_1, window_bounds = array<i64: 128, 32>}, {pipeline_mode = #tpu.pipeline_mode<synchronous>, transform_indices = @transform_2, window_bounds = array<i64: 32, 32>}, {pipeline_mode = #tpu.pipeline_mode<synchronous>, transform_indices = @transform_3, window_bounds = array<i64: 1, 32>}, {transform_indices = @transform_4, window_bounds = array<i64: 16, 32>}]} {
    %c0 = arith.constant 0 : index
    %c0_0 = arith.constant 0 : index
    %0 = vector.load %arg2[%c0, %c0_0] : memref<128x32xf32, #tpu.memory_space<vmem>>, vector<128x32xf32>
    %c0_1 = arith.constant 0 : index
    %c0_2 = arith.constant 0 : index
    %1 = vector.load %arg3[%c0_1, %c0_2] : memref<32x32xf32, #tpu.memory_space<vmem>>, vector<32x32xf32>
    %cst = arith.constant dense<0.000000e+00> : vector<128x32xf32>
    %2 = tpu.matmul %0, %1, %cst {dimension_numbers = #tpu.dot_dimension_numbers<[1], [0], [0], [1], [0, 0, 1, 1], [], []>} : vector<128x32xf32>, vector<32x32xf32>, vector<128x32xf32> -> vector<128x32xf32>
    %c0_3 = arith.constant 0 : index
    %c0_4 = arith.constant 0 : index
    %3 = vector.load %arg4[%c0_3, %c0_4] : memref<1x32xf32, #tpu.memory_space<vmem>>, vector<1x32xf32>
    %4 = vector.broadcast %3 : vector<1x32xf32> to vector<128x32xf32>
    %5 = arith.addf %2, %4 : vector<128x32xf32>
    %6 = vector.shape_cast %5 : vector<128x32xf32> to vector<16x8x32xf32>
    %cst_5 = arith.constant dense<0.000000e+00> : vector<16x32xf32>
    %7 = vector.multi_reduction <add>, %6, %cst_5 [1] : vector<16x8x32xf32> to vector<16x32xf32>
    %8 = vector.shape_cast %7 : vector<16x32xf32> to vector<16x1x32xf32>
    %cst_6 = arith.constant 8.000000e+00 : f32
    %9 = vector.broadcast %cst_6 : f32 to vector<16x1x32xf32>
    %10 = arith.divf %8, %9 : vector<16x1x32xf32>
    %11 = vector.broadcast %10 : vector<16x1x32xf32> to vector<16x8x32xf32>
    %12 = arith.mulf %6, %11 : vector<16x8x32xf32>
    %cst_7 = arith.constant dense<0xFF800000> : vector<16x32xf32>
    %13 = vector.multi_reduction <maximumf>, %12, %cst_7 [1] : vector<16x8x32xf32> to vector<16x32xf32>
    %14 = vector.shape_cast %13 : vector<16x32xf32> to vector<16x1x32xf32>
    %15 = vector.broadcast %14 : vector<16x1x32xf32> to vector<16x8x32xf32>
    %16 = arith.subf %12, %15 : vector<16x8x32xf32>
    %17 = math.exp %16 : vector<16x8x32xf32>
    %cst_8 = arith.constant dense<0.000000e+00> : vector<16x32xf32>
    %18 = vector.multi_reduction <add>, %17, %cst_8 [1] : vector<16x8x32xf32> to vector<16x32xf32>
    %c0_9 = arith.constant 0 : index
    %c0_10 = arith.constant 0 : index
    %19 = vector.load %arg1[%c0_9, %c0_10] : memref<128x32xf32, #tpu.memory_space<vmem>>, vector<128x32xf32>
    %20 = vector.shape_cast %19 : vector<128x32xf32> to vector<16x8x32xf32>
    %21 = arith.mulf %20, %17 : vector<16x8x32xf32>
    %cst_11 = arith.constant dense<0.000000e+00> : vector<16x32xf32>
    %22 = vector.multi_reduction <add>, %21, %cst_11 [1] : vector<16x8x32xf32> to vector<16x32xf32>
    %cst_12 = arith.constant 1.000000e+00 : f32
    %23 = vector.broadcast %cst_12 : f32 to vector<16x32xf32>
    %24 = arith.divf %23, %18 : vector<16x32xf32>
    %25 = arith.mulf %22, %24 : vector<16x32xf32>
    %c0_13 = arith.constant 0 : index
    %c0_14 = arith.constant 0 : index
    %26 = vector.load %arg5[%c0_13, %c0_14] : memref<16x32xf32, #tpu.memory_space<vmem>>, vector<16x32xf32>
    tpu.vector_store %arg5[%c0_13, %c0_14], %25 {strides = array<i32>} : memref<16x32xf32, #tpu.memory_space<vmem>>, vector<16x32xf32>,
    return
  }
  func.func @transform_0(%arg0: i32) -> (i32, i32) {
    %c0_i32 = arith.constant 0 : i32
    %c0_i32_0 = arith.constant 0 : i32
    return %arg0, %c0_i32 : i32, i32
  }
  func.func @transform_1(%arg0: i32) -> (i32, i32) {
    %c0_i32 = arith.constant 0 : i32
    %c0_i32_0 = arith.constant 0 : i32
    return %arg0, %c0_i32 : i32, i32
  }
  func.func @transform_2(%arg0: i32) -> (i32, i32) {
    %c0_i32 = arith.constant 0 : i32
    %c0_i32_0 = arith.constant 0 : i32
    %c0_i32_1 = arith.constant 0 : i32
    return %c0_i32, %c0_i32_0 : i32, i32
  }
  func.func @transform_3(%arg0: i32) -> (i32, i32) {
    %c0_i32 = arith.constant 0 : i32
    %c0_i32_0 = arith.constant 0 : i32
    %c0_i32_1 = arith.constant 0 : i32
    return %c0_i32, %c0_i32_0 : i32, i32
  }
  func.func @transform_4(%arg0: i32) -> (i32, i32) {
    %c0_i32 = arith.constant 0 : i32
    %c0_i32_0 = arith.constant 0 : i32
    return %arg0, %c0_i32 : i32, i32
  }
}

</mosaic_0001>

<llo_original>
// kernel: tpu_custom_call.1
$region0: #{tpu_custom_call.1}
  #allocation0 [shape = 'u32[]', space=smem, size = 0x4, offset = 0x4, fixed_abs, tag = 'smem constant byte address 0x4 - core index']
  #allocation1 [shape = 'u32[144,128]{1,0:T(1,128)}', space=vmem, size = 0x12000, scoped, tag = 'internal scratch']
  %s0 = inlined_call_operand.vmem [shape: f32[128,32], index: 0, kind: input, shape index: {}]
  %s1 = inlined_call_operand.vmem [shape: f32[128,32], index: 1, kind: input, shape index: {}]
  %s2 = inlined_call_operand.vmem [shape: f32[32,32], index: 2, kind: input, shape index: {}]
  %s3 = inlined_call_operand.vmem [shape: f32[1,32], index: 3, kind: input, shape index: {}]
  %s4 = inlined_call_operand.hbm [shape: f32[16,32], index: 4, kind: output, shape index: {}]
  %s5 = sld [smem:[#allocation0]]
  $region26: #{tpu_custom_call.1} parent=0
    _
  %s7 = ssub.s32 1, %s5
  %s8 = scalar_select 0, %s7, %s5
  $region1: #{tpu_custom_call.1} parent=0
    #allocation2 [shape = 'u8[8192]{0}', space=vmem, size = 0x2000, scoped, tag = 'output window, operand 0, single buffered']
    #allocation3 [shape = 's32[1]{0}', space=sflag, size = 0x4, scoped, tag = 'scoped memory for tpu_custom_call.1']
    %9 = vsyncpa [#allocation3], 0
    // Predicated region
    $region2: #{tpu_custom_call.1} parent=1 // pred_check
      _
    $region3: #{tpu_custom_call.1} parent=1 // pred_check_branch
      %11 = sbr.rel (0) target = $region5
    $region4: #{tpu_custom_call.1} parent=1 // pred_region
      _
    $region5: #{tpu_custom_call.1} parent=1 // pred_fallthru
      _
    // Predicated region
    $region6: #{tpu_custom_call.1} parent=1 // pred_check
      _
    $region7: #{tpu_custom_call.1} parent=1 // pred_check_branch
      %13 = sbr.rel (0) target = $region9
    $region8: #{tpu_custom_call.1} parent=1 // pred_region
      _
    $region9: #{tpu_custom_call.1} parent=1 // pred_fallthru
      _
    // Predicated region
    $region10: #{tpu_custom_call.1} parent=1 // pred_check
      _
    $region11: #{tpu_custom_call.1} parent=1 // pred_check_branch
      %15 = sbr.rel (0) target = $region13
    $region12: #{tpu_custom_call.1} parent=1 // pred_region
      _
    $region13: #{tpu_custom_call.1} parent=1 // pred_fallthru
      _
    // Predicated region
    $region14: #{tpu_custom_call.1} parent=1 // pred_check
      _
    $region15: #{tpu_custom_call.1} parent=1 // pred_check_branch
      %17 = sbr.rel (0) target = $region17
    $region16: #{tpu_custom_call.1} parent=1 // pred_region
      _
    $region17: #{tpu_custom_call.1} parent=1 // pred_fallthru
      _
    %v18 = vld [vmem:[%s1] sm:$0xff]
    %v19 = vld [vmem:[%s1 + $0x8] sm:$0xff]
    %v20 = vld [vmem:[%s1 + $0x10] sm:$0xff]
    %v21 = vld [vmem:[%s1 + $0x18] sm:$0xff]
    %v22 = vld [vmem:[%s1 + $0x20] sm:$0xff]
    %v23 = vld [vmem:[%s1 + $0x28] sm:$0xff]
    %v24 = vld [vmem:[%s1 + $0x30] sm:$0xff]
    %v25 = vld [vmem:[%s1 + $0x38] sm:$0xff]
    %v26 = vld [vmem:[%s1 + $0x40] sm:$0xff]
    %v27 = vld [vmem:[%s1 + $0x48] sm:$0xff]
    %v28 = vld [vmem:[%s1 + $0x50] sm:$0xff]
    %v29 = vld [vmem:[%s1 + $0x58] sm:$0xff]
    %v30 = vld [vmem:[%s1 + $0x60] sm:$0xff]
    %v31 = vld [vmem:[%s1 + $0x68] sm:$0xff]
    %v32 = vld [vmem:[%s1 + $0x70] sm:$0xff]
    %v33 = vld [vmem:[%s1 + $0x78] sm:$0xff]
    %v34 = vld [vmem:[%s2] sm:$0xff]
    %v35 = vld [vmem:[%s2 + $0x8] sm:$0xff]
    %v36 = vld [vmem:[%s2 + $0x10] sm:$0xff]
    %v37 = vld [vmem:[%s2 + $0x18] sm:$0xff]
    %v38 = vld [vmem:[%s3] sm:$0x1]
    %v40 = vlaneseq
    %v41 = vshrl.u32 %v40, 7
    %v42 = vsub.s32 0, %v41
    %v43 = vrot.slane %v38, %v42
    %vm45 = vcmask 261120
    %v47 = vsel %vm45, %v18, 0
    %v50 = vsel %vm45, %v19, 0
    %v53 = vsel %vm45, %v20, 0
    %v56 = vsel %vm45, %v21, 0
    %v59 = vsel %vm45, %v22, 0
    %v62 = vsel %vm45, %v23, 0
    %v65 = vsel %vm45, %v24, 0
    %v68 = vsel %vm45, %v25, 0
    %v71 = vsel %vm45, %v26, 0
    %v74 = vsel %vm45, %v27, 0
    %v77 = vsel %vm45, %v28, 0
    %v80 = vsel %vm45, %v29, 0
    %v83 = vsel %vm45, %v30, 0
    %v86 = vsel %vm45, %v31, 0
    %v89 = vsel %vm45, %v32, 0
    %v92 = vsel %vm45, %v33, 0
    %94 = vmatprep.subr.mxu0 0.0
    %95 = vmatpush1.msra.mxu0 %v34
    %96 = vmatprep.subr.mxu0 0.0
    %97 = vmatpush1.msra.mxu0 %v35
    %98 = vmatprep.subr.mxu0 0.0
    %99 = vmatpush1.msra.mxu0 %v36
    %100 = vmatprep.subr.mxu0 0.0
    %101 = vmatpush1.msra.mxu0 %v37
    %102 = vmatprep.subr.mxu0 0.0
    %103 = vmatpush1.msra.mxu0 0.0
    %104 = vmatprep.subr.mxu0 0.0
    %105 = vmatpush1.msra.mxu0 0.0
    %106 = vmatprep.subr.mxu0 0.0
    %107 = vmatpush1.msra.mxu0 0.0
    %108 = vmatprep.subr.mxu0 0.0
    %109 = vmatpush1.msra.mxu0 0.0
    %110 = vmatprep.subr.mxu0 0.0
    %111 = vmatpush1.msra.mxu0 0.0
    %112 = vmatprep.subr.mxu0 0.0
    %113 = vmatpush1.msra.mxu0 0.0
    %114 = vmatprep.subr.mxu0 0.0
    %115 = vmatpush1.msra.mxu0 0.0
    %116 = vmatprep.subr.mxu0 0.0
    %117 = vmatpush1.msra.mxu0 0.0
    %118 = vmatprep.subr.mxu0 0.0
    %119 = vmatpush1.msra.mxu0 0.0
    %120 = vmatprep.subr.mxu0 0.0
    %121 = vmatpush1.msra.mxu0 0.0
    %122 = vmatprep.subr.mxu0 0.0
    %123 = vmatpush1.msra.mxu0 0.0
    %124 = vmatprep.subr.mxu0 0.0
    %125 = vmatpush1.msra.mxu0 0.0
    %126 = vmatprep.subr.mxu0 0.0
    %127 = vmatpush1.msra.mxu0 0.0
    %128 = vmatprep.subr.mxu0 0.0
    %129 = vmatpush1.msra.mxu0 0.0
    %130 = vmatprep.subr.mxu0 0.0
    %131 = vmatpush1.msra.mxu0 0.0
    %132 = vmatprep.subr.mxu0 0.0
    %133 = vmatpush1.msra.mxu0 0.0
    %134 = vmatprep.subr.mxu0 0.0
    %135 = vmatpush1.msra.mxu0 0.0
    %136 = vmatprep.subr.mxu0 0.0
    %137 = vmatpush1.msra.mxu0 0.0
    %138 = vmatprep.subr.mxu0 0.0
    %139 = vmatpush1.msra.mxu0 0.0
    %140 = vmatprep.subr.mxu0 0.0
    %141 = vmatpush1.msra.mxu0 0.0
    %142 = vmatprep.subr.mxu0 0.0
    %143 = vmatpush1.msra.mxu0 0.0
    %144 = vmatprep.subr.mxu0 0.0
    %145 = vmatpush1.msra.mxu0 0.0
    %146 = vmatprep.subr.mxu0 0.0
    %147 = vmatpush1.msra.mxu0 0.0
    %148 = vmatprep.subr.mxu0 0.0
    %149 = vmatpush1.msra.mxu0 0.0
    %150 = vmatprep.subr.mxu0 0.0
    %151 = vmatpush1.msra.mxu0 0.0
    %152 = vmatprep.subr.mxu0 0.0
    %153 = vmatpush1.msra.mxu0 0.0
    %154 = vmatprep.subr.mxu0 0.0
    %155 = vmatpush1.msra.mxu0 0.0
    %156 = vmatprep.subr.mxu0 0.0
    %157 = vmatpush1.msra.mxu0 0.0
    %158 = vmatprep.mubr.f32.mxu0 0.0
    %159 = vmatmul.mubr.f32.gmra.mrb[0].mxu0 %v47
    %v160 = vpop.f32.mrb[0].mxu0
    %v161 = vadd.f32 %v43, %v160
    %v162 = vpop.f32.mrb[0].mxu0
    %163 = vmatprep.mubr.f32.mxu0 0.0
    %164 = vmatmul.mubr.f32.gmra.mrb[0].mxu0 %v50
    %v165 = vpop.f32.mrb[0].mxu0
    %v166 = vadd.f32 %v43, %v165
    %v167 = vpop.f32.mrb[0].mxu0
    %168 = vmatprep.mubr.f32.mxu0 0.0
    %169 = vmatmul.mubr.f32.gmra.mrb[0].mxu0 %v53
    %v170 = vpop.f32.mrb[0].mxu0
    %v171 = vadd.f32 %v43, %v170
    %v172 = vpop.f32.mrb[0].mxu0
    %173 = vmatprep.mubr.f32.mxu0 0.0
    %174 = vmatmul.mubr.f32.gmra.mrb[0].mxu0 %v56
    %v175 = vpop.f32.mrb[0].mxu0
    %v176 = vadd.f32 %v43, %v175
    %v177 = vpop.f32.mrb[0].mxu0
    %178 = vmatprep.mubr.f32.mxu0 0.0
    %179 = vmatmul.mubr.f32.gmra.mrb[0].mxu0 %v59
    %v180 = vpop.f32.mrb[0].mxu0
    %v181 = vadd.f32 %v43, %v180
    %v182 = vpop.f32.mrb[0].mxu0
    %183 = vmatprep.mubr.f32.mxu0 0.0
    %184 = vmatmul.mubr.f32.gmra.mrb[0].mxu0 %v62
    %v185 = vpop.f32.mrb[0].mxu0
    %v186 = vadd.f32 %v43, %v185
    %v187 = vpop.f32.mrb[0].mxu0
    %188 = vmatprep.mubr.f32.mxu0 0.0
    %189 = vmatmul.mubr.f32.gmra.mrb[0].mxu0 %v65
    %v190 = vpop.f32.mrb[0].mxu0
    %v191 = vadd.f32 %v43, %v190
    %v192 = vpop.f32.mrb[0].mxu0
    %193 = vmatprep.mubr.f32.mxu0 0.0
    %194 = vmatmul.mubr.f32.gmra.mrb[0].mxu0 %v68
    %v195 = vpop.f32.mrb[0].mxu0
    %v196 = vadd.f32 %v43, %v195
    %v197 = vpop.f32.mrb[0].mxu0
    %198 = vmatprep.mubr.f32.mxu0 0.0
    %199 = vmatmul.mubr.f32.gmra.mrb[0].mxu0 %v71
    %v200 = vpop.f32.mrb[0].mxu0
    %v201 = vadd.f32 %v43, %v200
    %v202 = vpop.f32.mrb[0].mxu0
    %203 = vmatprep.mubr.f32.mxu0 0.0
    %204 = vmatmul.mubr.f32.gmra.mrb[0].mxu0 %v74
    %v205 = vpop.f32.mrb[0].mxu0
    %v206 = vadd.f32 %v43, %v205
    %v207 = vpop.f32.mrb[0].mxu0
    %208 = vmatprep.mubr.f32.mxu0 0.0
    %209 = vmatmul.mubr.f32.gmra.mrb[0].mxu0 %v77
    %v210 = vpop.f32.mrb[0].mxu0
    %v211 = vadd.f32 %v43, %v210
    %v212 = vpop.f32.mrb[0].mxu0
    %213 = vmatprep.mubr.f32.mxu0 0.0
    %214 = vmatmul.mubr.f32.gmra.mrb[0].mxu0 %v80
    %v215 = vpop.f32.mrb[0].mxu0
    %v216 = vadd.f32 %v43, %v215
    %v217 = vpop.f32.mrb[0].mxu0
    %218 = vmatprep.mubr.f32.mxu0 0.0
    %219 = vmatmul.mubr.f32.gmra.mrb[0].mxu0 %v83
    %v220 = vpop.f32.mrb[0].mxu0
    %v221 = vadd.f32 %v43, %v220
    %v222 = vpop.f32.mrb[0].mxu0
    %223 = vmatprep.mubr.f32.mxu0 0.0
    %224 = vmatmul.mubr.f32.gmra.mrb[0].mxu0 %v86
    %v225 = vpop.f32.mrb[0].mxu0
    %v226 = vadd.f32 %v43, %v225
    %v227 = vpop.f32.mrb[0].mxu0
    %228 = vmatprep.mubr.f32.mxu0 0.0
    %229 = vmatmul.mubr.f32.gmra.mrb[0].mxu0 %v89
    %v230 = vpop.f32.mrb[0].mxu0
    %v231 = vadd.f32 %v43, %v230
    %v232 = vpop.f32.mrb[0].mxu0
    %233 = vmatprep.mubr.f32.mxu0 0.0
    %234 = vmatmul.mubr.f32.gmra.mrb[0].mxu0 %v92
    %v235 = vpop.f32.mrb[0].mxu0
    %v236 = vadd.f32 %v43, %v235
    %v237 = vpop.f32.mrb[0].mxu0
    %238 = vdwg.mxu0
    %v239 = vsel %vm45, %v161, 0.0
    %v240 = vrot.slane %v239, 4
    %v241 = vadd.f32 %v239, %v240
    %v242 = vrot.slane %v241, 2
    %v243 = vadd.f32 %v241, %v242
    %v244 = vrot.slane %v243, 1
    %v245 = vadd.f32 %v243, %v244
    %v246 = vsel %vm45, %v166, 0.0
    %v247 = vrot.slane %v246, 4
    %v248 = vadd.f32 %v246, %v247
    %v249 = vrot.slane %v248, 2
    %v250 = vadd.f32 %v248, %v249
    %v251 = vrot.slane %v250, 1
    %v252 = vadd.f32 %v250, %v251
    %v253 = vsel %vm45, %v171, 0.0
    %v254 = vrot.slane %v253, 4
    %v255 = vadd.f32 %v253, %v254
    %v256 = vrot.slane %v255, 2
    %v257 = vadd.f32 %v255, %v256
    %v258 = vrot.slane %v257, 1
    %v259 = vadd.f32 %v257, %v258
    %v260 = vsel %vm45, %v176, 0.0
    %v261 = vrot.slane %v260, 4
    %v262 = vadd.f32 %v260, %v261
    %v263 = vrot.slane %v262, 2
    %v264 = vadd.f32 %v262, %v263
    %v265 = vrot.slane %v264, 1
    %v266 = vadd.f32 %v264, %v265
    %v267 = vsel %vm45, %v181, 0.0
    %v268 = vrot.slane %v267, 4
    %v269 = vadd.f32 %v267, %v268
    %v270 = vrot.slane %v269, 2
    %v271 = vadd.f32 %v269, %v270
    %v272 = vrot.slane %v271, 1
    %v273 = vadd.f32 %v271, %v272
    %v274 = vsel %vm45, %v186, 0.0
    %v275 = vrot.slane %v274, 4
    %v276 = vadd.f32 %v274, %v275
    %v277 = vrot.slane %v276, 2
    %v278 = vadd.f32 %v276, %v277
    %v279 = vrot.slane %v278, 1
    %v280 = vadd.f32 %v278, %v279
    %v281 = vsel %vm45, %v191, 0.0
    %v282 = vrot.slane %v281, 4
    %v283 = vadd.f32 %v281, %v282
    %v284 = vrot.slane %v283, 2
    %v285 = vadd.f32 %v283, %v284
    %v286 = vrot.slane %v285, 1
    %v287 = vadd.f32 %v285, %v286
    %v288 = vsel %vm45, %v196, 0.0
    %v289 = vrot.slane %v288, 4
    %v290 = vadd.f32 %v288, %v289
    %v291 = vrot.slane %v290, 2
    %v292 = vadd.f32 %v290, %v291
    %v293 = vrot.slane %v292, 1
    %v294 = vadd.f32 %v292, %v293
    %v295 = vsel %vm45, %v201, 0.0
    %v296 = vrot.slane %v295, 4
    %v297 = vadd.f32 %v295, %v296
    %v298 = vrot.slane %v297, 2
    %v299 = vadd.f32 %v297, %v298
    %v300 = vrot.slane %v299, 1
    %v301 = vadd.f32 %v299, %v300
    %v302 = vsel %vm45, %v206, 0.0
    %v303 = vrot.slane %v302, 4
    %v304 = vadd.f32 %v302, %v303
    %v305 = vrot.slane %v304, 2
    %v306 = vadd.f32 %v304, %v305
    %v307 = vrot.slane %v306, 1
    %v308 = vadd.f32 %v306, %v307
    %v309 = vsel %vm45, %v211, 0.0
    %v310 = vrot.slane %v309, 4
    %v311 = vadd.f32 %v309, %v310
    %v312 = vrot.slane %v311, 2
    %v313 = vadd.f32 %v311, %v312
    %v314 = vrot.slane %v313, 1
    %v315 = vadd.f32 %v313, %v314
    %v316 = vsel %vm45, %v216, 0.0
    %v317 = vrot.slane %v316, 4
    %v318 = vadd.f32 %v316, %v317
    %v319 = vrot.slane %v318, 2
    %v320 = vadd.f32 %v318, %v319
    %v321 = vrot.slane %v320, 1
    %v322 = vadd.f32 %v320, %v321
    %v323 = vsel %vm45, %v221, 0.0
    %v324 = vrot.slane %v323, 4
    %v325 = vadd.f32 %v323, %v324
    %v326 = vrot.slane %v325, 2
    %v327 = vadd.f32 %v325, %v326
    %v328 = vrot.slane %v327, 1
    %v329 = vadd.f32 %v327, %v328
    %v330 = vsel %vm45, %v226, 0.0
    %v331 = vrot.slane %v330, 4
    %v332 = vadd.f32 %v330, %v331
    %v333 = vrot.slane %v332, 2
    %v334 = vadd.f32 %v332, %v333
    %v335 = vrot.slane %v334, 1
    %v336 = vadd.f32 %v334, %v335
    %v337 = vsel %vm45, %v231, 0.0
    %v338 = vrot.slane %v337, 4
    %v339 = vadd.f32 %v337, %v338
    %v340 = vrot.slane %v339, 2
    %v341 = vadd.f32 %v339, %v340
    %v342 = vrot.slane %v341, 1
    %v343 = vadd.f32 %v341, %v342
    %v344 = vsel %vm45, %v236, 0.0
    %v345 = vrot.slane %v344, 4
    %v346 = vadd.f32 %v344, %v345
    %v347 = vrot.slane %v346, 2
    %v348 = vadd.f32 %v346, %v347
    %v349 = vrot.slane %v348, 1
    %v350 = vadd.f32 %v348, %v349
    %v351 = vrcp.pop 8.0
    %v352 = vmul.f32 %v245, %v351
    %v353 = vmul.f32 %v252, %v351
    %v354 = vmul.f32 %v259, %v351
    %v355 = vmul.f32 %v266, %v351
    %v356 = vmul.f32 %v273, %v351
    %v357 = vmul.f32 %v280, %v351
    %v358 = vmul.f32 %v287, %v351
    %v359 = vmul.f32 %v294, %v351
    %v360 = vmul.f32 %v301, %v351
    %v361 = vmul.f32 %v308, %v351
    %v362 = vmul.f32 %v315, %v351
    %v363 = vmul.f32 %v322, %v351
    %v364 = vmul.f32 %v329, %v351
    %v365 = vmul.f32 %v336, %v351
    %v366 = vmul.f32 %v343, %v351
    %v367 = vmul.f32 %v350, %v351
    %v368 = vmul.f32 %v161, %v352
    %v369 = vmul.f32 %v166, %v353
    %v370 = vmul.f32 %v171, %v354
    %v371 = vmul.f32 %v176, %v355
    %v372 = vmul.f32 %v181, %v356
    %v373 = vmul.f32 %v186, %v357
    %v374 = vmul.f32 %v191, %v358
    %v375 = vmul.f32 %v196, %v359
    %v376 = vmul.f32 %v201, %v360
    %v377 = vmul.f32 %v206, %v361
    %v378 = vmul.f32 %v211, %v362
    %v379 = vmul.f32 %v216, %v363
    %v380 = vmul.f32 %v221, %v364
    %v381 = vmul.f32 %v226, %v365
    %v382 = vmul.f32 %v231, %v366
    %v383 = vmul.f32 %v236, %v367
    %v384 = vsel %vm45, %v368, -inf
    %v385 = vrot.slane %v384, 4
    %v386 = vmax.f32 %v384, %v385
    %v387 = vrot.slane %v386, 2
    %v388 = vmax.f32 %v386, %v387
    %v389 = vrot.slane %v388, 1
    %v390 = vmax.f32 %v388, %v389
    %v391 = vsel %vm45, %v369, -inf
    %v392 = vrot.slane %v391, 4
    %v393 = vmax.f32 %v391, %v392
    %v394 = vrot.slane %v393, 2
    %v395 = vmax.f32 %v393, %v394
    %v396 = vrot.slane %v395, 1
    %v397 = vmax.f32 %v395, %v396
    %v398 = vsel %vm45, %v370, -inf
    %v399 = vrot.slane %v398, 4
    %v400 = vmax.f32 %v398, %v399
    %v401 = vrot.slane %v400, 2
    %v402 = vmax.f32 %v400, %v401
    %v403 = vrot.slane %v402, 1
    %v404 = vmax.f32 %v402, %v403
    %v405 = vsel %vm45, %v371, -inf
    %v406 = vrot.slane %v405, 4
    %v407 = vmax.f32 %v405, %v406
    %v408 = vrot.slane %v407, 2
    %v409 = vmax.f32 %v407, %v408
    %v410 = vrot.slane %v409, 1
    %v411 = vmax.f32 %v409, %v410
    %v412 = vsel %vm45, %v372, -inf
    %v413 = vrot.slane %v412, 4
    %v414 = vmax.f32 %v412, %v413
    %v415 = vrot.slane %v414, 2
    %v416 = vmax.f32 %v414, %v415
    %v417 = vrot.slane %v416, 1
    %v418 = vmax.f32 %v416, %v417
    %v419 = vsel %vm45, %v373, -inf
    %v420 = vrot.slane %v419, 4
    %v421 = vmax.f32 %v419, %v420
    %v422 = vrot.slane %v421, 2
    %v423 = vmax.f32 %v421, %v422
    %v424 = vrot.slane %v423, 1
    %v425 = vmax.f32 %v423, %v424
    %v426 = vsel %vm45, %v374, -inf
    %v427 = vrot.slane %v426, 4
    %v428 = vmax.f32 %v426, %v427
    %v429 = vrot.slane %v428, 2
    %v430 = vmax.f32 %v428, %v429
    %v431 = vrot.slane %v430, 1
    %v432 = vmax.f32 %v430, %v431
    %v433 = vsel %vm45, %v375, -inf
    %v434 = vrot.slane %v433, 4
    %v435 = vmax.f32 %v433, %v434
    %v436 = vrot.slane %v435, 2
    %v437 = vmax.f32 %v435, %v436
    %v438 = vrot.slane %v437, 1
    %v439 = vmax.f32 %v437, %v438
    %v440 = vsel %vm45, %v376, -inf
    %v441 = vrot.slane %v440, 4
    %v442 = vmax.f32 %v440, %v441
    %v443 = vrot.slane %v442, 2
    %v444 = vmax.f32 %v442, %v443
    %v445 = vrot.slane %v444, 1
    %v446 = vmax.f32 %v444, %v445
    %v447 = vsel %vm45, %v377, -inf
    %v448 = vrot.slane %v447, 4
    %v449 = vmax.f32 %v447, %v448
    %v450 = vrot.slane %v449, 2
    %v451 = vmax.f32 %v449, %v450
    %v452 = vrot.slane %v451, 1
    %v453 = vmax.f32 %v451, %v452
    %v454 = vsel %vm45, %v378, -inf
    %v455 = vrot.slane %v454, 4
    %v456 = vmax.f32 %v454, %v455
    %v457 = vrot.slane %v456, 2
    %v458 = vmax.f32 %v456, %v457
    %v459 = vrot.slane %v458, 1
    %v460 = vmax.f32 %v458, %v459
    %v461 = vsel %vm45, %v379, -inf
    %v462 = vrot.slane %v461, 4
    %v463 = vmax.f32 %v461, %v462
    %v464 = vrot.slane %v463, 2
    %v465 = vmax.f32 %v463, %v464
    %v466 = vrot.slane %v465, 1
    %v467 = vmax.f32 %v465, %v466
    %v468 = vsel %vm45, %v380, -inf
    %v469 = vrot.slane %v468, 4
    %v470 = vmax.f32 %v468, %v469
    %v471 = vrot.slane %v470, 2
    %v472 = vmax.f32 %v470, %v471
    %v473 = vrot.slane %v472, 1
    %v474 = vmax.f32 %v472, %v473
    %v475 = vsel %vm45, %v381, -inf
    %v476 = vrot.slane %v475, 4
    %v477 = vmax.f32 %v475, %v476
    %v478 = vrot.slane %v477, 2
    %v479 = vmax.f32 %v477, %v478
    %v480 = vrot.slane %v479, 1
    %v481 = vmax.f32 %v479, %v480
    %v482 = vsel %vm45, %v382, -inf
    %v483 = vrot.slane %v482, 4
    %v484 = vmax.f32 %v482, %v483
    %v485 = vrot.slane %v484, 2
    %v486 = vmax.f32 %v484, %v485
    %v487 = vrot.slane %v486, 1
    %v488 = vmax.f32 %v486, %v487
    %v489 = vsel %vm45, %v383, -inf
    %v490 = vrot.slane %v489, 4
    %v491 = vmax.f32 %v489, %v490
    %v492 = vrot.slane %v491, 2
    %v493 = vmax.f32 %v491, %v492
    %v494 = vrot.slane %v493, 1
    %v495 = vmax.f32 %v493, %v494
    %v496 = vsub.f32 %v368, %v390
    %v497 = vsub.f32 %v369, %v397
    %v498 = vsub.f32 %v370, %v404
    %v499 = vsub.f32 %v371, %v411
    %v500 = vsub.f32 %v372, %v418
    %v501 = vsub.f32 %v373, %v425
    %v502 = vsub.f32 %v374, %v432
    %v503 = vsub.f32 %v375, %v439
    %v504 = vsub.f32 %v376, %v446
    %v505 = vsub.f32 %v377, %v453
    %v506 = vsub.f32 %v378, %v460
    %v507 = vsub.f32 %v379, %v467
    %v508 = vsub.f32 %v380, %v474
    %v509 = vsub.f32 %v381, %v481
    %v510 = vsub.f32 %v382, %v488
    %v511 = vsub.f32 %v383, %v495
    %v512 = vmul.f32 %v496, 1.442695
    %v513 = vpow.pop %v512
    %v514 = vmul.f32 %v497, 1.442695
    %v515 = vpow.pop %v514
    %v516 = vmul.f32 %v498, 1.442695
    %v517 = vpow.pop %v516
    %v518 = vmul.f32 %v499, 1.442695
    %v519 = vpow.pop %v518
    %v520 = vmul.f32 %v500, 1.442695
    %v521 = vpow.pop %v520
    %v522 = vmul.f32 %v501, 1.442695
    %v523 = vpow.pop %v522
    %v524 = vmul.f32 %v502, 1.442695
    %v525 = vpow.pop %v524
    %v526 = vmul.f32 %v503, 1.442695
    %v527 = vpow.pop %v526
    %v528 = vmul.f32 %v504, 1.442695
    %v529 = vpow.pop %v528
    %v530 = vmul.f32 %v505, 1.442695
    %v531 = vpow.pop %v530
    %v532 = vmul.f32 %v506, 1.442695
    %v533 = vpow.pop %v532
    %v534 = vmul.f32 %v507, 1.442695
    %v535 = vpow.pop %v534
    %v536 = vmul.f32 %v508, 1.442695
    %v537 = vpow.pop %v536
    %v538 = vmul.f32 %v509, 1.442695
    %v539 = vpow.pop %v538
    %v540 = vmul.f32 %v510, 1.442695
    %v541 = vpow.pop %v540
    %v542 = vmul.f32 %v511, 1.442695
    %v543 = vpow.pop %v542
    %v544 = vsel %vm45, %v513, 0.0
    %v545 = vrot.slane %v544, 4
    %v546 = vadd.f32 %v544, %v545
    %v547 = vrot.slane %v546, 2
    %v548 = vadd.f32 %v546, %v547
    %v549 = vrot.slane %v548, 1
    %v550 = vadd.f32 %v548, %v549
    %v551 = vsel %vm45, %v515, 0.0
    %v552 = vrot.slane %v551, 4
    %v553 = vadd.f32 %v551, %v552
    %v554 = vrot.slane %v553, 2
    %v555 = vadd.f32 %v553, %v554
    %v556 = vrot.slane %v555, 1
    %v557 = vadd.f32 %v555, %v556
    %v558 = vsel %vm45, %v517, 0.0
    %v559 = vrot.slane %v558, 4
    %v560 = vadd.f32 %v558, %v559
    %v561 = vrot.slane %v560, 2
    %v562 = vadd.f32 %v560, %v561
    %v563 = vrot.slane %v562, 1
    %v564 = vadd.f32 %v562, %v563
    %v565 = vsel %vm45, %v519, 0.0
    %v566 = vrot.slane %v565, 4
    %v567 = vadd.f32 %v565, %v566
    %v568 = vrot.slane %v567, 2
    %v569 = vadd.f32 %v567, %v568
    %v570 = vrot.slane %v569, 1
    %v571 = vadd.f32 %v569, %v570
    %v572 = vsel %vm45, %v521, 0.0
    %v573 = vrot.slane %v572, 4
    %v574 = vadd.f32 %v572, %v573
    %v575 = vrot.slane %v574, 2
    %v576 = vadd.f32 %v574, %v575
    %v577 = vrot.slane %v576, 1
    %v578 = vadd.f32 %v576, %v577
    %v579 = vsel %vm45, %v523, 0.0
    %v580 = vrot.slane %v579, 4
    %v581 = vadd.f32 %v579, %v580
    %v582 = vrot.slane %v581, 2
    %v583 = vadd.f32 %v581, %v582
    %v584 = vrot.slane %v583, 1
    %v585 = vadd.f32 %v583, %v584
    %v586 = vsel %vm45, %v525, 0.0
    %v587 = vrot.slane %v586, 4
    %v588 = vadd.f32 %v586, %v587
    %v589 = vrot.slane %v588, 2
    %v590 = vadd.f32 %v588, %v589
    %v591 = vrot.slane %v590, 1
    %v592 = vadd.f32 %v590, %v591
    %v593 = vsel %vm45, %v527, 0.0
    %v594 = vrot.slane %v593, 4
    %v595 = vadd.f32 %v593, %v594
    %v596 = vrot.slane %v595, 2
    %v597 = vadd.f32 %v595, %v596
    %v598 = vrot.slane %v597, 1
    %v599 = vadd.f32 %v597, %v598
    %v600 = vsel %vm45, %v529, 0.0
    %v601 = vrot.slane %v600, 4
    %v602 = vadd.f32 %v600, %v601
    %v603 = vrot.slane %v602, 2
    %v604 = vadd.f32 %v602, %v603
    %v605 = vrot.slane %v604, 1
    %v606 = vadd.f32 %v604, %v605
    %v607 = vsel %vm45, %v531, 0.0
    %v608 = vrot.slane %v607, 4
    %v609 = vadd.f32 %v607, %v608
    %v610 = vrot.slane %v609, 2
    %v611 = vadd.f32 %v609, %v610
    %v612 = vrot.slane %v611, 1
    %v613 = vadd.f32 %v611, %v612
    %v614 = vsel %vm45, %v533, 0.0
    %v615 = vrot.slane %v614, 4
    %v616 = vadd.f32 %v614, %v615
    %v617 = vrot.slane %v616, 2
    %v618 = vadd.f32 %v616, %v617
    %v619 = vrot.slane %v618, 1
    %v620 = vadd.f32 %v618, %v619
    %v621 = vsel %vm45, %v535, 0.0
    %v622 = vrot.slane %v621, 4
    %v623 = vadd.f32 %v621, %v622
    %v624 = vrot.slane %v623, 2
    %v625 = vadd.f32 %v623, %v624
    %v626 = vrot.slane %v625, 1
    %v627 = vadd.f32 %v625, %v626
    %v628 = vsel %vm45, %v537, 0.0
    %v629 = vrot.slane %v628, 4
    %v630 = vadd.f32 %v628, %v629
    %v631 = vrot.slane %v630, 2
    %v632 = vadd.f32 %v630, %v631
    %v633 = vrot.slane %v632, 1
    %v634 = vadd.f32 %v632, %v633
    %v635 = vsel %vm45, %v539, 0.0
    %v636 = vrot.slane %v635, 4
    %v637 = vadd.f32 %v635, %v636
    %v638 = vrot.slane %v637, 2
    %v639 = vadd.f32 %v637, %v638
    %v640 = vrot.slane %v639, 1
    %v641 = vadd.f32 %v639, %v640
    %v642 = vsel %vm45, %v541, 0.0
    %v643 = vrot.slane %v642, 4
    %v644 = vadd.f32 %v642, %v643
    %v645 = vrot.slane %v644, 2
    %v646 = vadd.f32 %v644, %v645
    %v647 = vrot.slane %v646, 1
    %v648 = vadd.f32 %v646, %v647
    %v649 = vsel %vm45, %v543, 0.0
    %v650 = vrot.slane %v649, 4
    %v651 = vadd.f32 %v649, %v650
    %v652 = vrot.slane %v651, 2
    %v653 = vadd.f32 %v651, %v652
    %v654 = vrot.slane %v653, 1
    %v655 = vadd.f32 %v653, %v654
    %v656 = vld [vmem:[%s0] sm:$0xff]
    %v657 = vld [vmem:[%s0 + $0x8] sm:$0xff]
    %v658 = vld [vmem:[%s0 + $0x10] sm:$0xff]
    %v659 = vld [vmem:[%s0 + $0x18] sm:$0xff]
    %v660 = vld [vmem:[%s0 + $0x20] sm:$0xff]
    %v661 = vld [vmem:[%s0 + $0x28] sm:$0xff]
    %v662 = vld [vmem:[%s0 + $0x30] sm:$0xff]
    %v663 = vld [vmem:[%s0 + $0x38] sm:$0xff]
    %v664 = vld [vmem:[%s0 + $0x40] sm:$0xff]
    %v665 = vld [vmem:[%s0 + $0x48] sm:$0xff]
    %v666 = vld [vmem:[%s0 + $0x50] sm:$0xff]
    %v667 = vld [vmem:[%s0 + $0x58] sm:$0xff]
    %v668 = vld [vmem:[%s0 + $0x60] sm:$0xff]
    %v669 = vld [vmem:[%s0 + $0x68] sm:$0xff]
    %v670 = vld [vmem:[%s0 + $0x70] sm:$0xff]
    %v671 = vld [vmem:[%s0 + $0x78] sm:$0xff]
    %v672 = vmul.f32 %v656, %v513
    %v673 = vmul.f32 %v657, %v515
    %v674 = vmul.f32 %v658, %v517
    %v675 = vmul.f32 %v659, %v519
    %v676 = vmul.f32 %v660, %v521
    %v677 = vmul.f32 %v661, %v523
    %v678 = vmul.f32 %v662, %v525
    %v679 = vmul.f32 %v663, %v527
    %v680 = vmul.f32 %v664, %v529
    %v681 = vmul.f32 %v665, %v531
    %v682 = vmul.f32 %v666, %v533
    %v683 = vmul.f32 %v667, %v535
    %v684 = vmul.f32 %v668, %v537
    %v685 = vmul.f32 %v669, %v539
    %v686 = vmul.f32 %v670, %v541
    %v687 = vmul.f32 %v671, %v543
    %v688 = vsel %vm45, %v672, 0.0
    %v689 = vrot.slane %v688, 4
    %v690 = vadd.f32 %v688, %v689
    %v691 = vrot.slane %v690, 2
    %v692 = vadd.f32 %v690, %v691
    %v693 = vrot.slane %v692, 1
    %v694 = vadd.f32 %v692, %v693
    %v695 = vsel %vm45, %v673, 0.0
    %v696 = vrot.slane %v695, 4
    %v697 = vadd.f32 %v695, %v696
    %v698 = vrot.slane %v697, 2
    %v699 = vadd.f32 %v697, %v698
    %v700 = vrot.slane %v699, 1
    %v701 = vadd.f32 %v699, %v700
    %v702 = vsel %vm45, %v674, 0.0
    %v703 = vrot.slane %v702, 4
    %v704 = vadd.f32 %v702, %v703
    %v705 = vrot.slane %v704, 2
    %v706 = vadd.f32 %v704, %v705
    %v707 = vrot.slane %v706, 1
    %v708 = vadd.f32 %v706, %v707
    %v709 = vsel %vm45, %v675, 0.0
    %v710 = vrot.slane %v709, 4
    %v711 = vadd.f32 %v709, %v710
    %v712 = vrot.slane %v711, 2
    %v713 = vadd.f32 %v711, %v712
    %v714 = vrot.slane %v713, 1
    %v715 = vadd.f32 %v713, %v714
    %v716 = vsel %vm45, %v676, 0.0
    %v717 = vrot.slane %v716, 4
    %v718 = vadd.f32 %v716, %v717
    %v719 = vrot.slane %v718, 2
    %v720 = vadd.f32 %v718, %v719
    %v721 = vrot.slane %v720, 1
    %v722 = vadd.f32 %v720, %v721
    %v723 = vsel %vm45, %v677, 0.0
    %v724 = vrot.slane %v723, 4
    %v725 = vadd.f32 %v723, %v724
    %v726 = vrot.slane %v725, 2
    %v727 = vadd.f32 %v725, %v726
    %v728 = vrot.slane %v727, 1
    %v729 = vadd.f32 %v727, %v728
    %v730 = vsel %vm45, %v678, 0.0
    %v731 = vrot.slane %v730, 4
    %v732 = vadd.f32 %v730, %v731
    %v733 = vrot.slane %v732, 2
    %v734 = vadd.f32 %v732, %v733
    %v735 = vrot.slane %v734, 1
    %v736 = vadd.f32 %v734, %v735
    %v737 = vsel %vm45, %v679, 0.0
    %v738 = vrot.slane %v737, 4
    %v739 = vadd.f32 %v737, %v738
    %v740 = vrot.slane %v739, 2
    %v741 = vadd.f32 %v739, %v740
    %v742 = vrot.slane %v741, 1
    %v743 = vadd.f32 %v741, %v742
    %v744 = vsel %vm45, %v680, 0.0
    %v745 = vrot.slane %v744, 4
    %v746 = vadd.f32 %v744, %v745
    %v747 = vrot.slane %v746, 2
    %v748 = vadd.f32 %v746, %v747
    %v749 = vrot.slane %v748, 1
    %v750 = vadd.f32 %v748, %v749
    %v751 = vsel %vm45, %v681, 0.0
    %v752 = vrot.slane %v751, 4
    %v753 = vadd.f32 %v751, %v752
    %v754 = vrot.slane %v753, 2
    %v755 = vadd.f32 %v753, %v754
    %v756 = vrot.slane %v755, 1
    %v757 = vadd.f32 %v755, %v756
    %v758 = vsel %vm45, %v682, 0.0
    %v759 = vrot.slane %v758, 4
    %v760 = vadd.f32 %v758, %v759
    %v761 = vrot.slane %v760, 2
    %v762 = vadd.f32 %v760, %v761
    %v763 = vrot.slane %v762, 1
    %v764 = vadd.f32 %v762, %v763
    %v765 = vsel %vm45, %v683, 0.0
    %v766 = vrot.slane %v765, 4
    %v767 = vadd.f32 %v765, %v766
    %v768 = vrot.slane %v767, 2
    %v769 = vadd.f32 %v767, %v768
    %v770 = vrot.slane %v769, 1
    %v771 = vadd.f32 %v769, %v770
    %v772 = vsel %vm45, %v684, 0.0
    %v773 = vrot.slane %v772, 4
    %v774 = vadd.f32 %v772, %v773
    %v775 = vrot.slane %v774, 2
    %v776 = vadd.f32 %v774, %v775
    %v777 = vrot.slane %v776, 1
    %v778 = vadd.f32 %v776, %v777
    %v779 = vsel %vm45, %v685, 0.0
    %v780 = vrot.slane %v779, 4
    %v781 = vadd.f32 %v779, %v780
    %v782 = vrot.slane %v781, 2
    %v783 = vadd.f32 %v781, %v782
    %v784 = vrot.slane %v783, 1
    %v785 = vadd.f32 %v783, %v784
    %v786 = vsel %vm45, %v686, 0.0
    %v787 = vrot.slane %v786, 4
    %v788 = vadd.f32 %v786, %v787
    %v789 = vrot.slane %v788, 2
    %v790 = vadd.f32 %v788, %v789
    %v791 = vrot.slane %v790, 1
    %v792 = vadd.f32 %v790, %v791
    %v793 = vsel %vm45, %v687, 0.0
    %v794 = vrot.slane %v793, 4
    %v795 = vadd.f32 %v793, %v794
    %v796 = vrot.slane %v795, 2
    %v797 = vadd.f32 %v795, %v796
    %v798 = vrot.slane %v797, 1
    %v799 = vadd.f32 %v797, %v798
    %v800 = vrcp.pop %v550
    %v801 = vmul.f32 1.0, %v800
    %v802 = vrcp.pop %v557
    %v803 = vmul.f32 1.0, %v802
    %v804 = vrcp.pop %v564
    %v805 = vmul.f32 1.0, %v804
    %v806 = vrcp.pop %v571
    %v807 = vmul.f32 1.0, %v806
    %v808 = vrcp.pop %v578
    %v809 = vmul.f32 1.0, %v808
    %v810 = vrcp.pop %v585
    %v811 = vmul.f32 1.0, %v810
    %v812 = vrcp.pop %v592
    %v813 = vmul.f32 1.0, %v812
    %v814 = vrcp.pop %v599
    %v815 = vmul.f32 1.0, %v814
    %v816 = vrcp.pop %v606
    %v817 = vmul.f32 1.0, %v816
    %v818 = vrcp.pop %v613
    %v819 = vmul.f32 1.0, %v818
    %v820 = vrcp.pop %v620
    %v821 = vmul.f32 1.0, %v820
    %v822 = vrcp.pop %v627
    %v823 = vmul.f32 1.0, %v822
    %v824 = vrcp.pop %v634
    %v825 = vmul.f32 1.0, %v824
    %v826 = vrcp.pop %v641
    %v827 = vmul.f32 1.0, %v826
    %v828 = vrcp.pop %v648
    %v829 = vmul.f32 1.0, %v828
    %v830 = vrcp.pop %v655
    %v831 = vmul.f32 1.0, %v830
    %v832 = vmul.f32 %v694, %v801
    %v833 = vmul.f32 %v701, %v803
    %v834 = vmul.f32 %v708, %v805
    %v835 = vmul.f32 %v715, %v807
    %v836 = vmul.f32 %v722, %v809
    %v837 = vmul.f32 %v729, %v811
    %v838 = vmul.f32 %v736, %v813
    %v839 = vmul.f32 %v743, %v815
    %v840 = vmul.f32 %v750, %v817
    %v841 = vmul.f32 %v757, %v819
    %v842 = vmul.f32 %v764, %v821
    %v843 = vmul.f32 %v771, %v823
    %v844 = vmul.f32 %v778, %v825
    %v845 = vmul.f32 %v785, %v827
    %v846 = vmul.f32 %v792, %v829
    %v847 = vmul.f32 %v799, %v831
    %vm864 = vcmask 1041409
    %v865 = vsel %vm864, %v833, %v832
    %vm866 = vcmask 1042434
    %v867 = vsel %vm866, %v834, %v865
    %vm868 = vcmask 1043459
    %v869 = vsel %vm868, %v835, %v867
    %vm870 = vcmask 1044484
    %v871 = vsel %vm870, %v836, %v869
    %vm872 = vcmask 1045509
    %v873 = vsel %vm872, %v837, %v871
    %vm874 = vcmask 1046534
    %v875 = vsel %vm874, %v838, %v873
    %vm876 = vcmask 1047559
    %v877 = vsel %vm876, %v839, %v875
    %v878 = vsel %vm864, %v841, %v840
    %v879 = vsel %vm866, %v842, %v878
    %v880 = vsel %vm868, %v843, %v879
    %v881 = vsel %vm870, %v844, %v880
    %v882 = vsel %vm872, %v845, %v881
    %v883 = vsel %vm874, %v846, %v882
    %v884 = vsel %vm876, %v847, %v883
    %887 = vst.msk [vmem:[#allocation2] sm:$0xff] %vm45, %v877
    %888 = vst.msk [vmem:[#allocation2 + $0x8] sm:$0xff] %vm45, %v884
    // Predicated region
    $region18: #{tpu_custom_call.1} parent=1 // pred_check
      _
    $region19: #{tpu_custom_call.1} parent=1 // pred_check_branch
      %890 = sbr.rel (0) target = $region21
    $region20: #{tpu_custom_call.1} parent=1 // pred_region
      %s892 = ssub.s32 256, 256
      %893 = vsyncadd [#allocation3], %s892
      %s894 = sshll.u32 [#allocation2], 4
      %s895 = int_to_ptr.vmem [resolvable:$true] %s894
      %900 = dma.vmem_to_hbm [thread:$0]  %s895, 256, %s4, [#allocation3], 128, 128, 8
    $region21: #{tpu_custom_call.1} parent=1 // pred_fallthru
      _
    // Predicated region
    $region22: #{tpu_custom_call.1} parent=1 // pred_check
      _
    $region23: #{tpu_custom_call.1} parent=1 // pred_check_branch
      %902 = sbr.rel (0) target = $region25
    $region24: #{tpu_custom_call.1} parent=1 // pred_region
      %903 = dma.done [#allocation3], 256
    $region25: #{tpu_custom_call.1} parent=1 // pred_fallthru
      _
    %904 = vsyncpa [#allocation3], 1

</llo_original>
